<compile_context>
chip_gen: v6e
topology: v6e:2x2x1
jax: 0.10.0
libtpu: 0.0.40
codegen_flags: <defaults>
</compile_context>

<pallas_src>
import functools

import jax
import jax.numpy as jnp
from jax.experimental import pallas as pl
from jax.experimental.pallas import tpu as pltpu


def _round_up(x, m):
    return ((x + m - 1) // m) * m


def gbp_kernel(s_ref, v_ref, wd_ref, wso_s_ref, wso_v_ref, bso_ref,
               wup_ref, sum3_ref, mrep_ref, s_out_ref, v_out_ref):
    """One TILE_N-row tile of the default-config GBP forward.

    Layouts (xyz interleaved along lanes: index 3*j + c, c in {x,y,z}):
      s_ref     : (T, SI)
      v_ref     : (T, 3*VI)        natural row-major layout of v (N, VI, 3)
      wd_ref    : (3*VI, 3*H)      kron(vector_down.weight.T, I3)
      wso_s_ref : (SI, SO)         scalar_out.weight.T[:SI]
      wso_v_ref : (H,  SO)         scalar_out.weight.T[SI:]
      bso_ref   : (1,  SO)
      wup_ref   : (3*H, 3*VO)      kron(vector_up.weight.T, I3)
      sum3_ref  : (3*H, H)         kron(I_H, ones(3,1))   (sum over xyz)
      mrep_ref  : (3*VO, 3*VO)     kron(I_VO, ones(3,3))  (sum over xyz, re-broadcast)
      s_out_ref : (T, SO)
      v_out_ref : (T, 3*VO)        natural row-major layout of v_out (N, VO, 3)
    """
    f32 = jnp.float32

    # vector_down over all xyz components in ONE MXU matmul (f32 accumulation).
    h = jnp.dot(v_ref[...], wd_ref[...], preferred_element_type=f32)   # (T, 3H)

    # safe_norm over xyz: squared values reduced over the interleaved c index
    # with a tiny 0/1 matmul (MXU has plenty of slack; no cross-lane VPU work).
    vnorm = jnp.sqrt(
        jnp.dot(h * h, sum3_ref[...], preferred_element_type=f32)) + 1e-8  # (T, H)

    # scalar_out(cat([s, vnorm], -1)) with the weight split in the wrapper.
    s_pre = (jnp.dot(s_ref[...], wso_s_ref[...], preferred_element_type=f32)
             + jnp.dot(vnorm, wso_v_ref[...], preferred_element_type=f32)
             + bso_ref[...])                                             # (T, SO)

    # vector_up over all xyz components in ONE MXU matmul.
    u = jnp.dot(h, wup_ref[...], preferred_element_type=f32)            # (T, 3VO)

    # gate = sigmoid(safe_norm(v_rep, dim=-1)) broadcast back over xyz:
    # mrep both reduces over c and re-broadcasts, so the gate is already in the
    # interleaved layout. The divide goes to the EUP via approx reciprocal.
    unorm_rep = jnp.sqrt(
        jnp.dot(u * u, mrep_ref[...], preferred_element_type=f32)) + 1e-8
    gate = pl.reciprocal(1.0 + jnp.exp(-unorm_rep), approx=True)

    v_out_ref[...] = (u * gate).astype(v_out_ref.dtype)
    s_out_ref[...] = jnp.maximum(s_pre, 0.0).astype(s_out_ref.dtype)    # relu


@functools.partial(jax.jit, static_argnames=("tile_n",))
def gbp_forward(s, v, w_down, w_scalar_out, b_scalar_out, w_up, *, tile_n=None):
    """Default-config GBP forward.

    s: (N, SI)                     v: (N, VI, 3)
    w_down:       (H, VI)          (torch Linear weight layout: (out, in))
    w_scalar_out: (SO, SI + H)     b_scalar_out: (SO,)
    w_up:         (VO, H)
    Returns (s_out (N, SO), v_out (N, VO, 3)).
    """
    N, SI = s.shape
    _, VI, _ = v.shape
    H = w_down.shape[0]
    SO = w_scalar_out.shape[0]
    VO = w_up.shape[0]
    f32 = jnp.float32

    # ---- weight preparation (tiny, once per call; no activation traffic) ----
    eye3 = jnp.eye(3, dtype=f32)
    # kron(W.T, I3) applies the Linear independently to x/y/z while staying in
    # the natural interleaved lane layout -> no HBM transpose of v or v_out.
    wd_big = jnp.kron(jnp.transpose(w_down).astype(f32), eye3).astype(v.dtype)
    wup_big = jnp.kron(jnp.transpose(w_up).astype(f32), eye3)             # f32
    wso = jnp.transpose(w_scalar_out)                                     # (SI+H, SO)
    wso_s = wso[:SI].astype(s.dtype)
    wso_v = wso[SI:].astype(f32)
    bso = b_scalar_out.reshape(1, SO).astype(f32)
    sum3 = jnp.kron(jnp.eye(H, dtype=f32), jnp.ones((3, 1), f32))         # (3H, H)
    mrep = jnp.kron(jnp.eye(VO, dtype=f32), jnp.ones((3, 3), f32))        # (3VO, 3VO)

    # Free reshape: (N, VI, 3) and (N, 3*VI) share the same row-major layout.
    v_flat = v.reshape(N, 3 * VI)

    # ---- tile_n derivation from a VMEM budget -------------------------------
    def lane_pad(f):
        return _round_up(f, 128)

    # double-buffered streamed inputs/outputs + f32 intermediates (per row, padded lanes)
    per_row_bytes = 4 * (
        2 * (lane_pad(SI) + lane_pad(3 * VI))
        + 2 * (lane_pad(SO) + lane_pad(3 * VO))
        + 2 * lane_pad(3 * H) + lane_pad(H) + lane_pad(SO) + 3 * lane_pad(3 * VO))
    if tile_n is None:
        vmem_budget = 20 * 1024 * 1024          # conservative; fits v7x's 64 MiB/TC
        tile_n = min(8192, max(8, (vmem_budget // per_row_bytes) // 8 * 8))
    # Keep both v7x TensorCores busy when N allows (grid >= 2) without shrinking
    # tiles for large N; ragged tails are handled by Pallas partial blocks.
    if N >= 16:
        tile_n = min(int(tile_n), _round_up((N + 1) // 2, 8))
    else:
        tile_n = 8
    tile_n = max(8, (int(tile_n) // 8) * 8)     # sublane multiple
    num_tiles = pl.cdiv(N, tile_n)

    row_spec = lambda i: (i, 0)
    const_spec = lambda i: (0, 0)               # weights resident in VMEM

    s_out, v_out_flat = pl.pallas_call(
        gbp_kernel,
        out_shape=(
            jax.ShapeDtypeStruct((N, SO), s.dtype),
            jax.ShapeDtypeStruct((N, 3 * VO), v.dtype),
        ),
        grid=(num_tiles,),
        in_specs=[
            pl.BlockSpec((tile_n, SI), row_spec),
            pl.BlockSpec((tile_n, 3 * VI), row_spec),
            pl.BlockSpec((3 * VI, 3 * H), const_spec),
            pl.BlockSpec((SI, SO), const_spec),
            pl.BlockSpec((H, SO), const_spec),
            pl.BlockSpec((1, SO), const_spec),
            pl.BlockSpec((3 * H, 3 * VO), const_spec),
            pl.BlockSpec((3 * H, H), const_spec),
            pl.BlockSpec((3 * VO, 3 * VO), const_spec),
        ],
        out_specs=(
            pl.BlockSpec((tile_n, SO), row_spec),
            pl.BlockSpec((tile_n, 3 * VO), row_spec),
        ),
        compiler_params=pltpu.CompilerParams(
            dimension_semantics=("parallel",),          # megacore on v7x
            vmem_limit_bytes=48 * 1024 * 1024,          # < 64 MiB physical on v7x
        ),
    )(s, v_flat, wd_big, wso_s, wso_v, bso, wup_big, sum3, mrep)

    # Free reshape back to (N, VO, 3); no transpose, no extra HBM pass.
    return s_out, v_out_flat.reshape(N, VO, 3)


def gbp_reference(s, v, w_down, w_scalar_out, b_scalar_out, w_up):
    """Pure-JAX mirror of the PyTorch GBP forward (default config)."""
    v_pre = jnp.swapaxes(v, -1, -2)                          # (N, 3, VI)
    vh = v_pre @ w_down.T                                    # (N, 3, H)
    vnorm = jnp.sqrt(jnp.sum(vh ** 2, axis=-2)) + 1e-8       # (N, H)
    merged = jnp.concatenate([s, vnorm], axis=-1)
    s_pre = merged @ w_scalar_out.T + b_scalar_out
    v_rep = jnp.swapaxes(vh @ w_up.T, -1, -2)                # (N, VO, 3)
    gate = 1.0 / (1.0 + jnp.exp(
        -(jnp.sqrt(jnp.sum(v_rep ** 2, axis=-1, keepdims=True)) + 1e-8)))
    return jnp.maximum(s_pre, 0.0), v_rep * gate


if __name__ == "__main__":
    # Small shapes consistent with the module:
    #   N=24 nodes, scalar dims 32->32, vector dims 16->16, bottleneck=1 -> H=16.
    # Auto-derived tile_n here is 16 -> 2 grid steps with a partial last block,
    # exercising both the multi-step pipeline and the masked ragged tail.
    N, SI, VI = 24, 32, 16
    SO, VO = 32, 16
    H = max(VI, VO)

    key = jax.random.PRNGKey(0)
    ks, kv, k1, k2, k3, k4 = jax.random.split(key, 6)
    s = jax.random.normal(ks, (N, SI), dtype=jnp.float32)
    v = jax.random.normal(kv, (N, VI, 3), dtype=jnp.float32)
    w_down = jax.random.normal(k1, (H, VI), dtype=jnp.float32) * 0.2
    w_scalar_out = jax.random.normal(k2, (SO, SI + H), dtype=jnp.float32) * 0.2
    b_scalar_out = jax.random.normal(k3, (SO,), dtype=jnp.float32) * 0.2
    w_up = jax.random.normal(k4, (VO, H), dtype=jnp.float32) * 0.2

    s_out, v_out = gbp_forward(s, v, w_down, w_scalar_out, b_scalar_out, w_up)
    jax.block_until_ready((s_out, v_out))

    s_expect, v_expect = gbp_reference(s, v, w_down, w_scalar_out,
                                       b_scalar_out, w_up)
    # Scalar path is exact f32; vector path uses the EUP approximate reciprocal
    # in the sigmoid, which introduces a small (~1e-3-level) numeric delta.
    assert jnp.allclose(s_out, s_expect, atol=1e-4, rtol=1e-4), "scalar mismatch"
    assert jnp.allclose(v_out, v_expect, atol=1e-2, rtol=1e-2), "vector mismatch"

    print("KERNEL_OK")
</pallas_src>

<mosaic_0001>
module attributes {stable_mosaic.version = 11 : i64} {
  func.func @gbp_kernel(%arg0: i32, %arg1: memref<16x32xf32, #tpu.memory_space<vmem>>, %arg2: memref<16x48xf32, #tpu.memory_space<vmem>>, %arg3: memref<48x48xf32, #tpu.memory_space<vmem>>, %arg4: memref<32x32xf32, #tpu.memory_space<vmem>>, %arg5: memref<16x32xf32, #tpu.memory_space<vmem>>, %arg6: memref<1x32xf32, #tpu.memory_space<vmem>>, %arg7: memref<48x48xf32, #tpu.memory_space<vmem>>, %arg8: memref<48x16xf32, #tpu.memory_space<vmem>>, %arg9: memref<48x48xf32, #tpu.memory_space<vmem>>, %arg10: memref<16x32xf32, #tpu.memory_space<vmem>>, %arg11: memref<16x48xf32, #tpu.memory_space<vmem>>) attributes {dimension_semantics = [#tpu.dimension_semantics<parallel>], iteration_bounds = array<i64: 2>, scalar_prefetch = 0 : i64, scratch_operands = 0 : i64, tpu.core_type = #tpu.core_type<tc>, window_params = [{transform_indices = @transform_0, window_bounds = array<i64: 16, 32>}, {transform_indices = @transform_1, window_bounds = array<i64: 16, 48>}, {pipeline_mode = #tpu.pipeline_mode<synchronous>, transform_indices = @transform_2, window_bounds = array<i64: 48, 48>}, {pipeline_mode = #tpu.pipeline_mode<synchronous>, transform_indices = @transform_3, window_bounds = array<i64: 32, 32>}, {pipeline_mode = #tpu.pipeline_mode<synchronous>, transform_indices = @transform_4, window_bounds = array<i64: 16, 32>}, {pipeline_mode = #tpu.pipeline_mode<synchronous>, transform_indices = @transform_5, window_bounds = array<i64: 1, 32>}, {pipeline_mode = #tpu.pipeline_mode<synchronous>, transform_indices = @transform_6, window_bounds = array<i64: 48, 48>}, {pipeline_mode = #tpu.pipeline_mode<synchronous>, transform_indices = @transform_7, window_bounds = array<i64: 48, 16>}, {pipeline_mode = #tpu.pipeline_mode<synchronous>, transform_indices = @transform_8, window_bounds = array<i64: 48, 48>}, {transform_indices = @transform_9, window_bounds = array<i64: 16, 32>}, {transform_indices = @transform_10, window_bounds = array<i64: 16, 48>}]} {
    %c0 = arith.constant 0 : index
    %c0_0 = arith.constant 0 : index
    %0 = vector.load %arg2[%c0, %c0_0] : memref<16x48xf32, #tpu.memory_space<vmem>>, vector<16x48xf32>
    %c0_1 = arith.constant 0 : index
    %c0_2 = arith.constant 0 : index
    %1 = vector.load %arg3[%c0_1, %c0_2] : memref<48x48xf32, #tpu.memory_space<vmem>>, vector<48x48xf32>
    %cst = arith.constant dense<0.000000e+00> : vector<16x48xf32>
    %2 = tpu.matmul %0, %1, %cst {dimension_numbers = #tpu.dot_dimension_numbers<[1], [0], [0], [1], [0, 0, 1, 1], [], []>} : vector<16x48xf32>, vector<48x48xf32>, vector<16x48xf32> -> vector<16x48xf32>
    %3 = arith.mulf %2, %2 : vector<16x48xf32>
    %c0_3 = arith.constant 0 : index
    %c0_4 = arith.constant 0 : index
    %4 = vector.load %arg8[%c0_3, %c0_4] : memref<48x16xf32, #tpu.memory_space<vmem>>, vector<48x16xf32>
    %cst_5 = arith.constant dense<0.000000e+00> : vector<16x16xf32>
    %5 = tpu.matmul %3, %4, %cst_5 {dimension_numbers = #tpu.dot_dimension_numbers<[1], [0], [0], [1], [0, 0, 1, 1], [], []>} : vector<16x48xf32>, vector<48x16xf32>, vector<16x16xf32> -> vector<16x16xf32>
    %6 = math.sqrt %5 : vector<16x16xf32>
    %cst_6 = arith.constant 9.99999993E-9 : f32
    %7 = vector.broadcast %cst_6 : f32 to vector<16x16xf32>
    %8 = arith.addf %6, %7 : vector<16x16xf32>
    %c0_7 = arith.constant 0 : index
    %c0_8 = arith.constant 0 : index
    %9 = vector.load %arg1[%c0_7, %c0_8] : memref<16x32xf32, #tpu.memory_space<vmem>>, vector<16x32xf32>
    %c0_9 = arith.constant 0 : index
    %c0_10 = arith.constant 0 : index
    %10 = vector.load %arg4[%c0_9, %c0_10] : memref<32x32xf32, #tpu.memory_space<vmem>>, vector<32x32xf32>
    %cst_11 = arith.constant dense<0.000000e+00> : vector<16x32xf32>
    %11 = tpu.matmul %9, %10, %cst_11 {dimension_numbers = #tpu.dot_dimension_numbers<[1], [0], [0], [1], [0, 0, 1, 1], [], []>} : vector<16x32xf32>, vector<32x32xf32>, vector<16x32xf32> -> vector<16x32xf32>
    %c0_12 = arith.constant 0 : index
    %c0_13 = arith.constant 0 : index
    %12 = vector.load %arg5[%c0_12, %c0_13] : memref<16x32xf32, #tpu.memory_space<vmem>>, vector<16x32xf32>
    %cst_14 = arith.constant dense<0.000000e+00> : vector<16x32xf32>
    %13 = tpu.matmul %8, %12, %cst_14 {dimension_numbers = #tpu.dot_dimension_numbers<[1], [0], [0], [1], [0, 0, 1, 1], [], []>} : vector<16x16xf32>, vector<16x32xf32>, vector<16x32xf32> -> vector<16x32xf32>
    %14 = arith.addf %11, %13 : vector<16x32xf32>
    %c0_15 = arith.constant 0 : index
    %c0_16 = arith.constant 0 : index
    %15 = vector.load %arg6[%c0_15, %c0_16] : memref<1x32xf32, #tpu.memory_space<vmem>>, vector<1x32xf32>
    %16 = vector.broadcast %15 : vector<1x32xf32> to vector<16x32xf32>
    %17 = arith.addf %14, %16 : vector<16x32xf32>
    %c0_17 = arith.constant 0 : index
    %c0_18 = arith.constant 0 : index
    %18 = vector.load %arg7[%c0_17, %c0_18] : memref<48x48xf32, #tpu.memory_space<vmem>>, vector<48x48xf32>
    %cst_19 = arith.constant dense<0.000000e+00> : vector<16x48xf32>
    %19 = tpu.matmul %2, %18, %cst_19 {dimension_numbers = #tpu.dot_dimension_numbers<[1], [0], [0], [1], [0, 0, 1, 1], [], []>} : vector<16x48xf32>, vector<48x48xf32>, vector<16x48xf32> -> vector<16x48xf32>
    %20 = arith.mulf %19, %19 : vector<16x48xf32>
    %c0_20 = arith.constant 0 : index
    %c0_21 = arith.constant 0 : index
    %21 = vector.load %arg9[%c0_20, %c0_21] : memref<48x48xf32, #tpu.memory_space<vmem>>, vector<48x48xf32>
    %cst_22 = arith.constant dense<0.000000e+00> : vector<16x48xf32>
    %22 = tpu.matmul %20, %21, %cst_22 {dimension_numbers = #tpu.dot_dimension_numbers<[1], [0], [0], [1], [0, 0, 1, 1], [], []>} : vector<16x48xf32>, vector<48x48xf32>, vector<16x48xf32> -> vector<16x48xf32>
    %23 = math.sqrt %22 : vector<16x48xf32>
    %cst_23 = arith.constant 9.99999993E-9 : f32
    %24 = vector.broadcast %cst_23 : f32 to vector<16x48xf32>
    %25 = arith.addf %23, %24 : vector<16x48xf32>
    %cst_24 = arith.constant 0.000000e+00 : f32
    %26 = vector.broadcast %cst_24 : f32 to vector<16x48xf32>
    %27 = arith.subf %26, %25 : vector<16x48xf32>
    %28 = math.exp %27 : vector<16x48xf32>
    %cst_25 = arith.constant 1.000000e+00 : f32
    %29 = vector.broadcast %cst_25 : f32 to vector<16x48xf32>
    %30 = arith.addf %29, %28 : vector<16x48xf32>
    %31 = tpu.reciprocal %30 {approx = true} : vector<16x48xf32> -> vector<16x48xf32>
    %32 = arith.mulf %19, %31 : vector<16x48xf32>
    %c0_26 = arith.constant 0 : index
    %c0_27 = arith.constant 0 : index
    %33 = vector.load %arg11[%c0_26, %c0_27] : memref<16x48xf32, #tpu.memory_space<vmem>>, vector<16x48xf32>
    tpu.vector_store %arg11[%c0_26, %c0_27], %32 {strides = array<i32>} : memref<16x48xf32, #tpu.memory_space<vmem>>, vector<16x48xf32>,
    %cst_28 = arith.constant 0.000000e+00 : f32
    %34 = vector.broadcast %cst_28 : f32 to vector<16x32xf32>
    %35 = arith.maximumf %17, %34 : vector<16x32xf32>
    %c0_29 = arith.constant 0 : index
    %c0_30 = arith.constant 0 : index
    %36 = vector.load %arg10[%c0_29, %c0_30] : memref<16x32xf32, #tpu.memory_space<vmem>>, vector<16x32xf32>
    tpu.vector_store %arg10[%c0_29, %c0_30], %35 {strides = array<i32>} : memref<16x32xf32, #tpu.memory_space<vmem>>, vector<16x32xf32>,
    return
  }
  func.func @transform_0(%arg0: i32) -> (i32, i32) {
    %c0_i32 = arith.constant 0 : i32
    %c0_i32_0 = arith.constant 0 : i32
    return %arg0, %c0_i32 : i32, i32
  }
  func.func @transform_1(%arg0: i32) -> (i32, i32) {
    %c0_i32 = arith.constant 0 : i32
    %c0_i32_0 = arith.constant 0 : i32
    return %arg0, %c0_i32 : i32, i32
  }
  func.func @transform_2(%arg0: i32) -> (i32, i32) {
    %c0_i32 = arith.constant 0 : i32
    %c0_i32_0 = arith.constant 0 : i32
    %c0_i32_1 = arith.constant 0 : i32
    return %c0_i32, %c0_i32_0 : i32, i32
  }
  func.func @transform_3(%arg0: i32) -> (i32, i32) {
    %c0_i32 = arith.constant 0 : i32
    %c0_i32_0 = arith.constant 0 : i32
    %c0_i32_1 = arith.constant 0 : i32
    return %c0_i32, %c0_i32_0 : i32, i32
  }
  func.func @transform_4(%arg0: i32) -> (i32, i32) {
    %c0_i32 = arith.constant 0 : i32
    %c0_i32_0 = arith.constant 0 : i32
    %c0_i32_1 = arith.constant 0 : i32
    return %c0_i32, %c0_i32_0 : i32, i32
  }
  func.func @transform_5(%arg0: i32) -> (i32, i32) {
    %c0_i32 = arith.constant 0 : i32
    %c0_i32_0 = arith.constant 0 : i32
    %c0_i32_1 = arith.constant 0 : i32
    return %c0_i32, %c0_i32_0 : i32, i32
  }
  func.func @transform_6(%arg0: i32) -> (i32, i32) {
    %c0_i32 = arith.constant 0 : i32
    %c0_i32_0 = arith.constant 0 : i32
    %c0_i32_1 = arith.constant 0 : i32
    return %c0_i32, %c0_i32_0 : i32, i32
  }
  func.func @transform_7(%arg0: i32) -> (i32, i32) {
    %c0_i32 = arith.constant 0 : i32
    %c0_i32_0 = arith.constant 0 : i32
    %c0_i32_1 = arith.constant 0 : i32
    return %c0_i32, %c0_i32_0 : i32, i32
  }
  func.func @transform_8(%arg0: i32) -> (i32, i32) {
    %c0_i32 = arith.constant 0 : i32
    %c0_i32_0 = arith.constant 0 : i32
    %c0_i32_1 = arith.constant 0 : i32
    return %c0_i32, %c0_i32_0 : i32, i32
  }
  func.func @transform_9(%arg0: i32) -> (i32, i32) {
    %c0_i32 = arith.constant 0 : i32
    %c0_i32_0 = arith.constant 0 : i32
    return %arg0, %c0_i32 : i32, i32
  }
  func.func @transform_10(%arg0: i32) -> (i32, i32) {
    %c0_i32 = arith.constant 0 : i32
    %c0_i32_0 = arith.constant 0 : i32
    return %arg0, %c0_i32 : i32, i32
  }
}

</mosaic_0001>

<llo_original>
// kernel: gbp_forward.1
$region0: #{gbp_forward.1}
  #allocation0 [shape = 'u32[]', space=smem, size = 0x4, offset = 0x4, fixed_abs, tag = 'smem constant byte address 0x4 - core index']
  #allocation1 [shape = 'u32[144,128]{1,0:T(1,128)}', space=vmem, size = 0x12000, scoped, tag = 'internal scratch']
  %s0 = inlined_call_operand.vmem [shape: f32[24,32], index: 0, kind: input, shape index: {}]
  %s1 = inlined_call_operand.vmem [shape: f32[24,48], index: 1, kind: input, shape index: {}]
  %s2 = inlined_call_operand.vmem [shape: f32[48,48], index: 2, kind: input, shape index: {}]
  %s3 = inlined_call_operand.vmem [shape: f32[32,32], index: 3, kind: input, shape index: {}]
  %s4 = inlined_call_operand.vmem [shape: f32[16,32], index: 4, kind: input, shape index: {}]
  %s5 = inlined_call_operand.vmem [shape: f32[1,32], index: 5, kind: input, shape index: {}]
  %s6 = inlined_call_operand.vmem [shape: f32[48,48], index: 6, kind: input, shape index: {}]
  %s7 = inlined_call_operand.vmem [shape: f32[48,16], index: 7, kind: input, shape index: {}]
  %s8 = inlined_call_operand.vmem [shape: f32[48,48], index: 8, kind: input, shape index: {}]
  %s9 = inlined_call_operand.hbm [shape: f32[24,32], index: 9, kind: output, shape index: {0}]
  %s10 = inlined_call_operand.vmem [shape: f32[24,48], index: 10, kind: output, shape index: {1}]
  %11 = xla_tuple %s9, %s10
  %s12 = sld [smem:[#allocation0]]
  $region125: #{gbp_forward.1} parent=0
    _
  %s14 = ssub.s32 1, %s12
  %s15 = scalar_select 0, %s14, %s12
  $region1: #{gbp_forward.1} parent=0
    #allocation2 [shape = 'u8[16384]{0}', space=vmem, size = 0x4000, scoped, tag = 'output window, operand 0']
    #allocation3 [shape = 's32[2]{0}', space=sflag, size = 0x8, scoped, tag = 'scoped memory for gbp_forward.1']
    #allocation4 [shape = 'u8[16384]{0}', space=vmem, size = 0x4000, scoped, tag = 'output window, operand 1']
    %16 = vsyncpa [#allocation3], 0
    %s17 = scalar_lea.sflag [#allocation3], 1
    %18 = vsyncpa %s17, 0
    loop: start=0, step=1, limit=4
    $region2: #{gbp_forward.1} parent=1 // loop_pre_header
      _
    $region3: #{gbp_forward.1} parent=1 // loop_header
      %s20 = sphi 0, %s24
      %p21 = scmp.ge.s32.totalorder %s20, 4
      %s30 = sphi 0, %s32
      %s33 = sphi 0, %s30
      %s34 = sphi 0, %s33
      %s50 = sphi 0, %s34
      %s56 = sphi 0, %s58
      %s59 = sphi 0, %s56
      %s60 = sphi 0, %s59
      %s76 = sphi 0, %s60
      %s80 = sphi 0, %s80
      %s82 = sphi 0, %s80
      %s83 = sphi 0, %s82
      %s97 = sphi 0, %s83
      %s101 = sphi 0, %s101
      %s103 = sphi 0, %s101
      %s104 = sphi 0, %s103
      %s118 = sphi 0, %s104
      %s122 = sphi 0, %s122
      %s124 = sphi 0, %s122
      %s125 = sphi 0, %s124
      %s139 = sphi 0, %s125
      %s143 = sphi 0, %s143
      %s145 = sphi 0, %s143
      %s146 = sphi 0, %s145
      %s160 = sphi 0, %s146
      %s164 = sphi 0, %s164
      %s166 = sphi 0, %s164
      %s167 = sphi 0, %s166
      %s181 = sphi 0, %s167
      %s185 = sphi 0, %s185
      %s187 = sphi 0, %s185
      %s188 = sphi 0, %s187
      %s202 = sphi 0, %s188
      %s206 = sphi 0, %s206
      %s208 = sphi 0, %s206
      %s209 = sphi 0, %s208
      %s223 = sphi 0, %s209
      %s229 = sphi 0, %s231
      %s232 = sphi 0, %s229
      %s233 = sphi 0, %s232
      %s249 = sphi 0, %s233
      %s255 = sphi 0, %s257
      %s258 = sphi 0, %s255
      %s259 = sphi 0, %s258
      %s275 = sphi 0, %s259
    $region4: #{gbp_forward.1} parent=1 // loop_header_branch
      %23 = sbr.rel (%p21) target = $region8
    $region5: #{gbp_forward.1} parent=1 // loop_body
      %s25 = ssub.s32 %s20, 1
      %s26 = ssub.s32 %s20, 2
      %s27 = sadd.s32 %s20, 1
      %s28 = ssub.s32 %s20, %s27
      %p29 = scmp.eq.s32.totalorder %s28, 0
      %s31 = sadd.s32 %s30, 1
      %s32 = scalar_select %p29, %s30, %s31
      %p35 = pneg %p29
      %p36 = scmp.eq.s32.totalorder %s20, 1
      %p37 = por %p35, %p36
      %p38 = scmp.ne.s32.totalorder %s30, %s33
      %p39 = scmp.eq.s32.totalorder %s20, 0
      %p40 = por %p38, %p39
      %p41 = scmp.ne.s32.totalorder %s30, %s33
      %p42 = scmp.eq.s32.totalorder %s25, 1
      %p43 = por %p41, %p42
      %p44 = scmp.ne.s32.totalorder %s33, %s34
      %p45 = scmp.eq.s32.totalorder %s25, 0
      %p46 = por %p44, %p45
      %p47 = scmp.ne.s32.totalorder %s33, %s34
      %p48 = scmp.eq.s32.totalorder %s26, 1
      %p49 = por %p47, %p48
      %p51 = scmp.ne.s32.totalorder %s34, %s50
      %p52 = scmp.eq.s32.totalorder %s26, 0
      %p53 = por %p51, %p52
      %s54 = ssub.s32 %s20, %s27
      %p55 = scmp.eq.s32.totalorder %s54, 0
      %s57 = sadd.s32 %s56, 1
      %s58 = scalar_select %p55, %s56, %s57
      %p61 = pneg %p55
      %p62 = scmp.eq.s32.totalorder %s20, 1
      %p63 = por %p61, %p62
      %p64 = scmp.ne.s32.totalorder %s56, %s59
      %p65 = scmp.eq.s32.totalorder %s20, 0
      %p66 = por %p64, %p65
      %p67 = scmp.ne.s32.totalorder %s56, %s59
      %p68 = scmp.eq.s32.totalorder %s25, 1
      %p69 = por %p67, %p68
      %p70 = scmp.ne.s32.totalorder %s59, %s60
      %p71 = scmp.eq.s32.totalorder %s25, 0
      %p72 = por %p70, %p71
      %p73 = scmp.ne.s32.totalorder %s59, %s60
      %p74 = scmp.eq.s32.totalorder %s26, 1
      %p75 = por %p73, %p74
      %p77 = scmp.ne.s32.totalorder %s60, %s76
      %p78 = scmp.eq.s32.totalorder %s26, 0
      %p79 = por %p77, %p78
      %s81 = sadd.s32 %s80, 1
      %p84 = scmp.eq.s32.totalorder %s20, 1
      %p85 = scmp.ne.s32.totalorder %s80, %s82
      %p86 = scmp.eq.s32.totalorder %s20, 0
      %p87 = por %p85, %p86
      %p88 = scmp.ne.s32.totalorder %s80, %s82
      %p89 = scmp.eq.s32.totalorder %s25, 1
      %p90 = por %p88, %p89
      %p91 = scmp.ne.s32.totalorder %s82, %s83
      %p92 = scmp.eq.s32.totalorder %s25, 0
      %p93 = por %p91, %p92
      %p94 = scmp.ne.s32.totalorder %s82, %s83
      %p95 = scmp.eq.s32.totalorder %s26, 1
      %p96 = por %p94, %p95
      %p98 = scmp.ne.s32.totalorder %s83, %s97
      %p99 = scmp.eq.s32.totalorder %s26, 0
      %p100 = por %p98, %p99
      %s102 = sadd.s32 %s101, 1
      %p105 = scmp.eq.s32.totalorder %s20, 1
      %p106 = scmp.ne.s32.totalorder %s101, %s103
      %p107 = scmp.eq.s32.totalorder %s20, 0
      %p108 = por %p106, %p107
      %p109 = scmp.ne.s32.totalorder %s101, %s103
      %p110 = scmp.eq.s32.totalorder %s25, 1
      %p111 = por %p109, %p110
      %p112 = scmp.ne.s32.totalorder %s103, %s104
      %p113 = scmp.eq.s32.totalorder %s25, 0
      %p114 = por %p112, %p113
      %p115 = scmp.ne.s32.totalorder %s103, %s104
      %p116 = scmp.eq.s32.totalorder %s26, 1
      %p117 = por %p115, %p116
      %p119 = scmp.ne.s32.totalorder %s104, %s118
      %p120 = scmp.eq.s32.totalorder %s26, 0
      %p121 = por %p119, %p120
      %s123 = sadd.s32 %s122, 1
      %p126 = scmp.eq.s32.totalorder %s20, 1
      %p127 = scmp.ne.s32.totalorder %s122, %s124
      %p128 = scmp.eq.s32.totalorder %s20, 0
      %p129 = por %p127, %p128
      %p130 = scmp.ne.s32.totalorder %s122, %s124
      %p131 = scmp.eq.s32.totalorder %s25, 1
      %p132 = por %p130, %p131
      %p133 = scmp.ne.s32.totalorder %s124, %s125
      %p134 = scmp.eq.s32.totalorder %s25, 0
      %p135 = por %p133, %p134
      %p136 = scmp.ne.s32.totalorder %s124, %s125
      %p137 = scmp.eq.s32.totalorder %s26, 1
      %p138 = por %p136, %p137
      %p140 = scmp.ne.s32.totalorder %s125, %s139
      %p141 = scmp.eq.s32.totalorder %s26, 0
      %p142 = por %p140, %p141
      %s144 = sadd.s32 %s143, 1
      %p147 = scmp.eq.s32.totalorder %s20, 1
      %p148 = scmp.ne.s32.totalorder %s143, %s145
      %p149 = scmp.eq.s32.totalorder %s20, 0
      %p150 = por %p148, %p149
      %p151 = scmp.ne.s32.totalorder %s143, %s145
      %p152 = scmp.eq.s32.totalorder %s25, 1
      %p153 = por %p151, %p152
      %p154 = scmp.ne.s32.totalorder %s145, %s146
      %p155 = scmp.eq.s32.totalorder %s25, 0
      %p156 = por %p154, %p155
      %p157 = scmp.ne.s32.totalorder %s145, %s146
      %p158 = scmp.eq.s32.totalorder %s26, 1
      %p159 = por %p157, %p158
      %p161 = scmp.ne.s32.totalorder %s146, %s160
      %p162 = scmp.eq.s32.totalorder %s26, 0
      %p163 = por %p161, %p162
      %s165 = sadd.s32 %s164, 1
      %p168 = scmp.eq.s32.totalorder %s20, 1
      %p169 = scmp.ne.s32.totalorder %s164, %s166
      %p170 = scmp.eq.s32.totalorder %s20, 0
      %p171 = por %p169, %p170
      %p172 = scmp.ne.s32.totalorder %s164, %s166
      %p173 = scmp.eq.s32.totalorder %s25, 1
      %p174 = por %p172, %p173
      %p175 = scmp.ne.s32.totalorder %s166, %s167
      %p176 = scmp.eq.s32.totalorder %s25, 0
      %p177 = por %p175, %p176
      %p178 = scmp.ne.s32.totalorder %s166, %s167
      %p179 = scmp.eq.s32.totalorder %s26, 1
      %p180 = por %p178, %p179
      %p182 = scmp.ne.s32.totalorder %s167, %s181
      %p183 = scmp.eq.s32.totalorder %s26, 0
      %p184 = por %p182, %p183
      %s186 = sadd.s32 %s185, 1
      %p189 = scmp.eq.s32.totalorder %s20, 1
      %p190 = scmp.ne.s32.totalorder %s185, %s187
      %p191 = scmp.eq.s32.totalorder %s20, 0
      %p192 = por %p190, %p191
      %p193 = scmp.ne.s32.totalorder %s185, %s187
      %p194 = scmp.eq.s32.totalorder %s25, 1
      %p195 = por %p193, %p194
      %p196 = scmp.ne.s32.totalorder %s187, %s188
      %p197 = scmp.eq.s32.totalorder %s25, 0
      %p198 = por %p196, %p197
      %p199 = scmp.ne.s32.totalorder %s187, %s188
      %p200 = scmp.eq.s32.totalorder %s26, 1
      %p201 = por %p199, %p200
      %p203 = scmp.ne.s32.totalorder %s188, %s202
      %p204 = scmp.eq.s32.totalorder %s26, 0
      %p205 = por %p203, %p204
      %s207 = sadd.s32 %s206, 1
      %p210 = scmp.eq.s32.totalorder %s20, 1
      %p211 = scmp.ne.s32.totalorder %s206, %s208
      %p212 = scmp.eq.s32.totalorder %s20, 0
      %p213 = por %p211, %p212
      %p214 = scmp.ne.s32.totalorder %s206, %s208
      %p215 = scmp.eq.s32.totalorder %s25, 1
      %p216 = por %p214, %p215
      %p217 = scmp.ne.s32.totalorder %s208, %s209
      %p218 = scmp.eq.s32.totalorder %s25, 0
      %p219 = por %p217, %p218
      %p220 = scmp.ne.s32.totalorder %s208, %s209
      %p221 = scmp.eq.s32.totalorder %s26, 1
      %p222 = por %p220, %p221
      %p224 = scmp.ne.s32.totalorder %s209, %s223
      %p225 = scmp.eq.s32.totalorder %s26, 0
      %p226 = por %p224, %p225
      %s227 = ssub.s32 %s20, %s27
      %p228 = scmp.eq.s32.totalorder %s227, 0
      %s230 = sadd.s32 %s229, 1
      %s231 = scalar_select %p228, %s229, %s230
      %p234 = pneg %p228
      %p235 = scmp.eq.s32.totalorder %s20, 1
      %p236 = por %p234, %p235
      %p237 = scmp.ne.s32.totalorder %s229, %s232
      %p238 = scmp.eq.s32.totalorder %s20, 0
      %p239 = por %p237, %p238
      %p240 = scmp.ne.s32.totalorder %s229, %s232
      %p241 = scmp.eq.s32.totalorder %s25, 1
      %p242 = por %p240, %p241
      %p243 = scmp.ne.s32.totalorder %s232, %s233
      %p244 = scmp.eq.s32.totalorder %s25, 0
      %p245 = por %p243, %p244
      %p246 = scmp.ne.s32.totalorder %s232, %s233
      %p247 = scmp.eq.s32.totalorder %s26, 1
      %p248 = por %p246, %p247
      %p250 = scmp.ne.s32.totalorder %s233, %s249
      %p251 = scmp.eq.s32.totalorder %s26, 0
      %p252 = por %p250, %p251
      %s253 = ssub.s32 %s20, %s27
      %p254 = scmp.eq.s32.totalorder %s253, 0
      %s256 = sadd.s32 %s255, 1
      %s257 = scalar_select %p254, %s255, %s256
      %p260 = pneg %p254
      %p261 = scmp.eq.s32.totalorder %s20, 1
      %p262 = por %p260, %p261
      %p263 = scmp.ne.s32.totalorder %s255, %s258
      %p264 = scmp.eq.s32.totalorder %s20, 0
      %p265 = por %p263, %p264
      %p266 = scmp.ne.s32.totalorder %s255, %s258
      %p267 = scmp.eq.s32.totalorder %s25, 1
      %p268 = por %p266, %p267
      %p269 = scmp.ne.s32.totalorder %s258, %s259
      %p270 = scmp.eq.s32.totalorder %s25, 0
      %p271 = por %p269, %p270
      %p272 = scmp.ne.s32.totalorder %s258, %s259
      %p273 = scmp.eq.s32.totalorder %s26, 1
      %p274 = por %p272, %p273
      %p276 = scmp.ne.s32.totalorder %s259, %s275
      %p277 = scmp.eq.s32.totalorder %s26, 0
      %p278 = por %p276, %p277
      %p279 = scmp.le.s32.totalorder 1, %s20
      %p280 = scmp.lt.s32.totalorder %s20, 3
      %p281 = pnand %p279, %p280
      %p282 = pneg %p281
      // Predicated region
      $region9: #{gbp_forward.1} parent=5 // pred_check
        _
      $region10: #{gbp_forward.1} parent=5 // pred_check_branch
        %284 = sbr.rel (%p281) target = $region12
      $region11: #{gbp_forward.1} parent=5 // pred_region
        %s285 = ssub.s32 %s20, 1
        // Predicated region
        $region13: #{gbp_forward.1} parent=11 // pred_check
          %p286 = pneg %p93
        $region14: #{gbp_forward.1} parent=11 // pred_check_branch
          %288 = sbr.rel (%p286) target = $region16
        $region15: #{gbp_forward.1} parent=11 // pred_region
          _
        $region16: #{gbp_forward.1} parent=11 // pred_fallthru
          _
        // Predicated region
        $region17: #{gbp_forward.1} parent=11 // pred_check
          %p289 = pneg %p114
        $region18: #{gbp_forward.1} parent=11 // pred_check_branch
          %291 = sbr.rel (%p289) target = $region20
        $region19: #{gbp_forward.1} parent=11 // pred_region
          _
        $region20: #{gbp_forward.1} parent=11 // pred_fallthru
          _
        // Predicated region
        $region21: #{gbp_forward.1} parent=11 // pred_check
          %p292 = pneg %p135
        $region22: #{gbp_forward.1} parent=11 // pred_check_branch
          %294 = sbr.rel (%p292) target = $region24
        $region23: #{gbp_forward.1} parent=11 // pred_region
          _
        $region24: #{gbp_forward.1} parent=11 // pred_fallthru
          _
        // Predicated region
        $region25: #{gbp_forward.1} parent=11 // pred_check
          %p295 = pneg %p156
        $region26: #{gbp_forward.1} parent=11 // pred_check_branch
          %297 = sbr.rel (%p295) target = $region28
        $region27: #{gbp_forward.1} parent=11 // pred_region
          _
        $region28: #{gbp_forward.1} parent=11 // pred_fallthru
          _
        // Predicated region
        $region29: #{gbp_forward.1} parent=11 // pred_check
          %p298 = pneg %p177
        $region30: #{gbp_forward.1} parent=11 // pred_check_branch
          %300 = sbr.rel (%p298) target = $region32
        $region31: #{gbp_forward.1} parent=11 // pred_region
          _
        $region32: #{gbp_forward.1} parent=11 // pred_fallthru
          _
        // Predicated region
        $region33: #{gbp_forward.1} parent=11 // pred_check
          %p301 = pneg %p198
        $region34: #{gbp_forward.1} parent=11 // pred_check_branch
          %303 = sbr.rel (%p301) target = $region36
        $region35: #{gbp_forward.1} parent=11 // pred_region
          _
        $region36: #{gbp_forward.1} parent=11 // pred_fallthru
          _
        // Predicated region
        $region37: #{gbp_forward.1} parent=11 // pred_check
          %p304 = pneg %p219
        $region38: #{gbp_forward.1} parent=11 // pred_check_branch
          %306 = sbr.rel (%p304) target = $region40
        $region39: #{gbp_forward.1} parent=11 // pred_region
          _
        $region40: #{gbp_forward.1} parent=11 // pred_fallthru
          _
      $region12: #{gbp_forward.1} parent=5 // pred_fallthru
        _
      %p307 = scmp.lt.s32.totalorder %s20, 2
      // Predicated region
      $region41: #{gbp_forward.1} parent=5 // pred_check
        %p308 = pneg %p307
      $region42: #{gbp_forward.1} parent=5 // pred_check_branch
        %310 = sbr.rel (%p308) target = $region44
      $region43: #{gbp_forward.1} parent=5 // pred_region
        // Predicated region
        $region45: #{gbp_forward.1} parent=43 // pred_check
          %p311 = pneg %p40
        $region46: #{gbp_forward.1} parent=43 // pred_check_branch
          %313 = sbr.rel (%p311) target = $region48
        $region47: #{gbp_forward.1} parent=43 // pred_region
          %s314 = smul.u32 2, %s20
          %s315 = ssub.s32 3, %s314
          %p316 = scmp.lt.s32.totalorder %s315, 2
          %s317 = scalar_select %p316, %s315, 2
          %s318 = smul.u32 128, %s317
          %p319 = scmp.lt.s32.totalorder %s314, 2
          %s320 = scalar_select %p319, %s314, 2
          %s321 = smul.addr %s320, 8
          %s322 = scalar_lea.vmem %s0, %s321
          %s323 = smul.u32 2, %s20
          %s324 = ssub.s32 3, %s323
          %p325 = scmp.lt.s32.totalorder %s324, 2
          %s326 = scalar_select %p325, %s324, 2
          %s327 = smul.u32 128, %s326
        $region48: #{gbp_forward.1} parent=43 // pred_fallthru
          _
        // Predicated region
        $region49: #{gbp_forward.1} parent=43 // pred_check
          %p328 = pneg %p66
        $region50: #{gbp_forward.1} parent=43 // pred_check_branch
          %330 = sbr.rel (%p328) target = $region52
        $region51: #{gbp_forward.1} parent=43 // pred_region
          %s331 = smul.u32 2, %s20
          %s332 = ssub.s32 3, %s331
          %p333 = scmp.lt.s32.totalorder %s332, 2
          %s334 = scalar_select %p333, %s332, 2
          %s335 = smul.u32 128, %s334
          %p336 = scmp.lt.s32.totalorder %s331, 2
          %s337 = scalar_select %p336, %s331, 2
          %s338 = smul.addr %s337, 8
          %s339 = scalar_lea.vmem %s1, %s338
          %s340 = smul.u32 2, %s20
          %s341 = ssub.s32 3, %s340
          %p342 = scmp.lt.s32.totalorder %s341, 2
          %s343 = scalar_select %p342, %s341, 2
          %s344 = smul.u32 128, %s343
        $region52: #{gbp_forward.1} parent=43 // pred_fallthru
          _
      $region44: #{gbp_forward.1} parent=5 // pred_fallthru
        _
      %p345 = scmp.le.s32.totalorder 1, %s20
      %p346 = scmp.lt.s32.totalorder %s20, 3
      %p347 = pnand %p345, %p346
      %p348 = pneg %p347
      // Predicated region
      $region53: #{gbp_forward.1} parent=5 // pred_check
        _
      $region54: #{gbp_forward.1} parent=5 // pred_check_branch
        %350 = sbr.rel (%p347) target = $region56
      $region55: #{gbp_forward.1} parent=5 // pred_region
        %s351 = ssub.s32 %s20, 1
        %s352 = smul.u32 2, %s25
        %s353 = ssub.s32 3, %s352
        %p354 = scmp.lt.s32.totalorder %s353, 2
        %s355 = scalar_select %p354, %s353, 2
        %s356 = smul.u32 128, %s355
        %p357 = scmp.lt.s32.totalorder %s352, 2
        %s358 = scalar_select %p357, %s352, 2
        %s359 = smul.addr %s358, 8
        %s360 = scalar_lea.vmem %s0, %s359
        %p361 = pneg %p46
        %p362 = pneg %p43
        %s363 = smul.u32 2, %s25
        %s364 = ssub.s32 3, %s363
        %p365 = scmp.lt.s32.totalorder %s364, 2
        %s366 = scalar_select %p365, %s364, 2
        %s367 = smul.u32 128, %s366
        %p368 = scmp.lt.s32.totalorder %s363, 2
        %s369 = scalar_select %p368, %s363, 2
        %s370 = smul.addr %s369, 8
        %s371 = scalar_lea.vmem %s1, %s370
        %p372 = pneg %p72
        %p373 = pneg %p69
        %p374 = pneg %p93
        %p375 = pneg %p90
        %p376 = pneg %p114
        %p377 = pneg %p111
        %p378 = pneg %p135
        %p379 = pneg %p132
        %p380 = pneg %p156
        %p381 = pneg %p153
        %p382 = pneg %p177
        %p383 = pneg %p174
        %p384 = pneg %p198
        %p385 = pneg %p195
        %p386 = pneg %p219
        %p387 = pneg %p216
        %p388 = pneg %p245
        %p389 = pneg %p242
        %s390 = sand.u32 %s232, 1
        %s391 = scalar_lea.sflag [#allocation3], %s390
        %s392 = sand.u32 %s232, 1
        %s393 = smul.addr %s392, 16
        %s394 = scalar_lea.vmem [#allocation2], %s393
        %p395 = pneg %p271
        %p396 = pneg %p268
        %s397 = sand.u32 %s258, 1
        %s398 = sand.u32 %s258, 1
        %s399 = smul.addr %s398, 16
        %s400 = scalar_lea.vmem [#allocation4], %s399
        %s401 = smul.u32 2, %s25
        %s402 = ssub.s32 3, %s401
        %p403 = scmp.lt.s32.totalorder %s402, 2
        %s404 = scalar_select %p403, %s402, 2
        %s405 = smul.u32 128, %s404
        %p406 = scmp.lt.s32.totalorder %s401, 2
        %s407 = scalar_select %p406, %s401, 2
        %s408 = smul.addr %s407, 8
        %s409 = scalar_lea.vmem %s0, %s408
        %s410 = smul.u32 2, %s25
        %s411 = ssub.s32 3, %s410
        %p412 = scmp.lt.s32.totalorder %s411, 2
        %s413 = scalar_select %p412, %s411, 2
        %s414 = smul.u32 128, %s413
        %s415 = smul.u32 2, %s25
        %s416 = ssub.s32 3, %s415
        %p417 = scmp.lt.s32.totalorder %s416, 2
        %s418 = scalar_select %p417, %s416, 2
        %s419 = smul.u32 128, %s418
        %p420 = scmp.lt.s32.totalorder %s415, 2
        %s421 = scalar_select %p420, %s415, 2
        %s422 = smul.addr %s421, 8
        %s423 = scalar_lea.vmem %s1, %s422
        %s424 = smul.u32 2, %s25
        %s425 = ssub.s32 3, %s424
        %p426 = scmp.lt.s32.totalorder %s425, 2
        %s427 = scalar_select %p426, %s425, 2
        %s428 = smul.u32 128, %s427
        %s429 = smul.u32 2, %s25
        %s430 = ssub.s32 3, %s429
        %p431 = scmp.lt.s32.totalorder %s430, 2
        %s432 = scalar_select %p431, %s430, 2
        %s433 = smul.u32 128, %s432
        %s434 = smul.u32 2, %s25
        %s435 = ssub.s32 3, %s434
        %p436 = scmp.lt.s32.totalorder %s435, 2
        %s437 = scalar_select %p436, %s435, 2
        %s438 = smul.u32 128, %s437
        %v439 = vld [vmem:[%s423] sm:$0xff]
        %v440 = vld [vmem:[%s423 + $0x8] sm:$0xff]
        %v441 = vld [vmem:[%s2] sm:$0xff]
        %v442 = vld [vmem:[%s2 + $0x8] sm:$0xff]
        %v443 = vld [vmem:[%s2 + $0x10] sm:$0xff]
        %v444 = vld [vmem:[%s2 + $0x18] sm:$0xff]
        %v445 = vld [vmem:[%s2 + $0x20] sm:$0xff]
        %v446 = vld [vmem:[%s2 + $0x28] sm:$0xff]
        %vm447 = vcmask 392192
        %v449 = vsel %vm447, %v439, 0
        %v452 = vsel %vm447, %v440, 0
        %454 = vmatprep.subr.mxu0 0.0
        %455 = vmatpush1.msra.mxu0 0.0
        %456 = vmatprep.subr.mxu0 0.0
        %457 = vmatpush1.msra.mxu0 0.0
        %458 = vmatprep.subr.mxu0 0.0
        %459 = vmatpush1.msra.mxu0 0.0
        %460 = vmatprep.subr.mxu0 0.0
        %461 = vmatpush1.msra.mxu0 0.0
        %462 = vmatprep.subr.mxu0 0.0
        %463 = vmatpush1.msra.mxu0 0.0
        %464 = vmatprep.subr.mxu0 0.0
        %465 = vmatpush1.msra.mxu0 0.0
        %466 = vmatprep.subr.mxu0 0.0
        %467 = vmatpush1.msra.mxu0 0.0
        %468 = vmatprep.subr.mxu0 0.0
        %469 = vmatpush1.msra.mxu0 0.0
        %470 = vmatprep.subr.mxu0 0.0
        %471 = vmatpush1.msra.mxu0 0.0
        %472 = vmatprep.subr.mxu0 0.0
        %473 = vmatpush1.msra.mxu0 0.0
        %474 = vmatprep.subr.mxu0 0.0
        %475 = vmatpush1.msra.mxu0 %v446
        %476 = vmatprep.subr.mxu0 0.0
        %477 = vmatpush1.msra.mxu0 %v445
        %478 = vmatprep.subr.mxu0 0.0
        %479 = vmatpush1.msra.mxu0 %v444
        %480 = vmatprep.subr.mxu0 0.0
        %481 = vmatpush1.msra.mxu0 %v443
        %482 = vmatprep.subr.mxu0 0.0
        %483 = vmatpush1.msra.mxu0 %v442
        %484 = vmatprep.subr.mxu0 0.0
        %485 = vmatpush1.msra.mxu0 %v441
        %486 = vmatprep.subr.mxu0 0.0
        %487 = vmatpush2.msra.mxu0 0.0
        %488 = vmatprep.subr.mxu0 0.0
        %489 = vmatpush2.msra.mxu0 0.0
        %490 = vmatprep.subr.mxu0 0.0
        %491 = vmatpush2.msra.mxu0 0.0
        %492 = vmatprep.subr.mxu0 0.0
        %493 = vmatpush2.msra.mxu0 0.0
        %494 = vmatprep.subr.mxu0 0.0
        %495 = vmatpush2.msra.mxu0 0.0
        %496 = vmatprep.subr.mxu0 0.0
        %497 = vmatpush2.msra.mxu0 0.0
        %498 = vmatprep.subr.mxu0 0.0
        %499 = vmatpush2.msra.mxu0 0.0
        %500 = vmatprep.subr.mxu0 0.0
        %501 = vmatpush2.msra.mxu0 0.0
        %502 = vmatprep.subr.mxu0 0.0
        %503 = vmatpush2.msra.mxu0 0.0
        %504 = vmatprep.subr.mxu0 0.0
        %505 = vmatpush2.msra.mxu0 0.0
        %506 = vmatprep.subr.mxu0 0.0
        %507 = vmatpush2.msra.mxu0 0.0
        %508 = vmatprep.subr.mxu0 0.0
        %509 = vmatpush2.msra.mxu0 0.0
        %510 = vmatprep.subr.mxu0 0.0
        %511 = vmatpush2.msra.mxu0 0.0
        %512 = vmatprep.subr.mxu0 0.0
        %513 = vmatpush2.msra.mxu0 0.0
        %514 = vmatprep.subr.mxu0 0.0
        %515 = vmatpush2.msra.mxu0 0.0
        %516 = vmatprep.subr.mxu0 0.0
        %517 = vmatpush2.msra.mxu0 0.0
        %518 = vmatprep.mubr.f32.mxu0 0.0
        %519 = vmatmul.mubr.f32.gmra.mxu0 %v449
        %v520 = vpop.f32.mrf.mxu0
        %v521 = vadd.f32 0.0, %v520
        %v522 = vpop.f32.mrf.mxu0
        %523 = vmatprep.mubr.f32.mxu0 0.0
        %524 = vmatmul.mubr.f32.gmra.mxu0 %v452
        %v525 = vpop.f32.mrf.mxu0
        %v526 = vadd.f32 0.0, %v525
        %v527 = vpop.f32.mrf.mxu0
        %528 = vdwg.mxu0
        %v529 = vmul.f32 %v521, %v521
        %v530 = vmul.f32 %v526, %v526
        %v531 = vld [vmem:[%s7] sm:$0xff]
        %v532 = vld [vmem:[%s7 + $0x8] sm:$0xff]
        %v533 = vld [vmem:[%s7 + $0x10] sm:$0xff]
        %v534 = vld [vmem:[%s7 + $0x18] sm:$0xff]
        %v535 = vld [vmem:[%s7 + $0x20] sm:$0xff]
        %v536 = vld [vmem:[%s7 + $0x28] sm:$0xff]
        %v538 = vsel %vm447, %v529, 0
        %v541 = vsel %vm447, %v530, 0
        %543 = vmatprep.subr.mxu0 0.0
        %544 = vmatpush1.msra.mxu0 0.0
        %545 = vmatprep.subr.mxu0 0.0
        %546 = vmatpush1.msra.mxu0 0.0
        %547 = vmatprep.subr.mxu0 0.0
        %548 = vmatpush1.msra.mxu0 0.0
        %549 = vmatprep.subr.mxu0 0.0
        %550 = vmatpush1.msra.mxu0 0.0
        %551 = vmatprep.subr.mxu0 0.0
        %552 = vmatpush1.msra.mxu0 0.0
        %553 = vmatprep.subr.mxu0 0.0
        %554 = vmatpush1.msra.mxu0 0.0
        %555 = vmatprep.subr.mxu0 0.0
        %556 = vmatpush1.msra.mxu0 0.0
        %557 = vmatprep.subr.mxu0 0.0
        %558 = vmatpush1.msra.mxu0 0.0
        %559 = vmatprep.subr.mxu0 0.0
        %560 = vmatpush1.msra.mxu0 0.0
        %561 = vmatprep.subr.mxu0 0.0
        %562 = vmatpush1.msra.mxu0 0.0
        %563 = vmatprep.subr.mxu0 0.0
        %564 = vmatpush1.msra.mxu0 %v536
        %565 = vmatprep.subr.mxu0 0.0
        %566 = vmatpush1.msra.mxu0 %v535
        %567 = vmatprep.subr.mxu0 0.0
        %568 = vmatpush1.msra.mxu0 %v534
        %569 = vmatprep.subr.mxu0 0.0
        %570 = vmatpush1.msra.mxu0 %v533
        %571 = vmatprep.subr.mxu0 0.0
        %572 = vmatpush1.msra.mxu0 %v532
        %573 = vmatprep.subr.mxu0 0.0
        %574 = vmatpush1.msra.mxu0 %v531
        %575 = vmatprep.subr.mxu0 0.0
        %576 = vmatpush2.msra.mxu0 0.0
        %577 = vmatprep.subr.mxu0 0.0
        %578 = vmatpush2.msra.mxu0 0.0
        %579 = vmatprep.subr.mxu0 0.0
        %580 = vmatpush2.msra.mxu0 0.0
        %581 = vmatprep.subr.mxu0 0.0
        %582 = vmatpush2.msra.mxu0 0.0
        %583 = vmatprep.subr.mxu0 0.0
        %584 = vmatpush2.msra.mxu0 0.0
        %585 = vmatprep.subr.mxu0 0.0
        %586 = vmatpush2.msra.mxu0 0.0
        %587 = vmatprep.subr.mxu0 0.0
        %588 = vmatpush2.msra.mxu0 0.0
        %589 = vmatprep.subr.mxu0 0.0
        %590 = vmatpush2.msra.mxu0 0.0
        %591 = vmatprep.subr.mxu0 0.0
        %592 = vmatpush2.msra.mxu0 0.0
        %593 = vmatprep.subr.mxu0 0.0
        %594 = vmatpush2.msra.mxu0 0.0
        %595 = vmatprep.subr.mxu0 0.0
        %596 = vmatpush2.msra.mxu0 0.0
        %597 = vmatprep.subr.mxu0 0.0
        %598 = vmatpush2.msra.mxu0 0.0
        %599 = vmatprep.subr.mxu0 0.0
        %600 = vmatpush2.msra.mxu0 0.0
        %601 = vmatprep.subr.mxu0 0.0
        %602 = vmatpush2.msra.mxu0 0.0
        %603 = vmatprep.subr.mxu0 0.0
        %604 = vmatpush2.msra.mxu0 0.0
        %605 = vmatprep.subr.mxu0 0.0
        %606 = vmatpush2.msra.mxu0 0.0
        %607 = vmatprep.mubr.f32.mxu0 0.0
        %608 = vmatmul.mubr.f32.gmra.mxu0 %v538
        %v609 = vpop.f32.mrf.mxu0
        %v610 = vadd.f32 0.0, %v609
        %v611 = vpop.f32.mrf.mxu0
        %612 = vmatprep.mubr.f32.mxu0 0.0
        %613 = vmatmul.mubr.f32.gmra.mxu0 %v541
        %v614 = vpop.f32.mrf.mxu0
        %v615 = vadd.f32 0.0, %v614
        %v616 = vpop.f32.mrf.mxu0
        %617 = vdwg.mxu0
        %v618 = vrsqrt.pop %v610
        %v619 = vmul.f32 %v610, %v618
        %vm620 = vcmp.eq.f32.partialorder %v610, inf
        %v621 = vsel %vm620, %v610, %v619
        %vm622 = vcmp.eq.f32.partialorder %v610, 0.0
        %v623 = vand.u32 %v610, 2147483648
        %v624 = vsel %vm622, %v623, %v621
        %v625 = vrsqrt.pop %v615
        %v626 = vmul.f32 %v615, %v625
        %vm627 = vcmp.eq.f32.partialorder %v615, inf
        %v628 = vsel %vm627, %v615, %v626
        %vm629 = vcmp.eq.f32.partialorder %v615, 0.0
        %v630 = vand.u32 %v615, 2147483648
        %v631 = vsel %vm629, %v630, %v628
        %v632 = vadd.f32 %v624, 1e-08
        %v633 = vadd.f32 %v631, 1e-08
        %v634 = vld [vmem:[%s409] sm:$0xff]
        %v635 = vld [vmem:[%s409 + $0x8] sm:$0xff]
        %v636 = vld [vmem:[%s3] sm:$0xff]
        %v637 = vld [vmem:[%s3 + $0x8] sm:$0xff]
        %v638 = vld [vmem:[%s3 + $0x10] sm:$0xff]
        %v639 = vld [vmem:[%s3 + $0x18] sm:$0xff]
        %v640 = vld [vmem:[%s4] sm:$0xff]
        %v641 = vld [vmem:[%s4 + $0x8] sm:$0xff]
        %vm642 = vcmask 130048
        %v644 = vsel %vm642, %v632, 0
        %v647 = vsel %vm642, %v633, 0
        %649 = vmatprep.subr.mxu0 0.0
        %650 = vmatpush1.msra.mxu0 0.0
        %651 = vmatprep.subr.mxu0 0.0
        %652 = vmatpush1.msra.mxu0 0.0
        %653 = vmatprep.subr.mxu0 0.0
        %654 = vmatpush1.msra.mxu0 0.0
        %655 = vmatprep.subr.mxu0 0.0
        %656 = vmatpush1.msra.mxu0 0.0
        %657 = vmatprep.subr.mxu0 0.0
        %658 = vmatpush1.msra.mxu0 0.0
        %659 = vmatprep.subr.mxu0 0.0
        %660 = vmatpush1.msra.mxu0 0.0
        %661 = vmatprep.subr.mxu0 0.0
        %662 = vmatpush1.msra.mxu0 0.0
        %663 = vmatprep.subr.mxu0 0.0
        %664 = vmatpush1.msra.mxu0 0.0
        %665 = vmatprep.subr.mxu0 0.0
        %666 = vmatpush1.msra.mxu0 0.0
        %667 = vmatprep.subr.mxu0 0.0
        %668 = vmatpush1.msra.mxu0 0.0
        %669 = vmatprep.subr.mxu0 0.0
        %670 = vmatpush1.msra.mxu0 0.0
        %671 = vmatprep.subr.mxu0 0.0
        %672 = vmatpush1.msra.mxu0 0.0
        %673 = vmatprep.subr.mxu0 0.0
        %674 = vmatpush1.msra.mxu0 0.0
        %675 = vmatprep.subr.mxu0 0.0
        %676 = vmatpush1.msra.mxu0 0.0
        %677 = vmatprep.subr.mxu0 0.0
        %678 = vmatpush1.msra.mxu0 %v641
        %679 = vmatprep.subr.mxu0 0.0
        %680 = vmatpush1.msra.mxu0 %v640
        %681 = vmatprep.subr.mxu0 0.0
        %682 = vmatpush2.msra.mxu0 0.0
        %683 = vmatprep.subr.mxu0 0.0
        %684 = vmatpush2.msra.mxu0 0.0
        %685 = vmatprep.subr.mxu0 0.0
        %686 = vmatpush2.msra.mxu0 0.0
        %687 = vmatprep.subr.mxu0 0.0
        %688 = vmatpush2.msra.mxu0 0.0
        %689 = vmatprep.subr.mxu0 0.0
        %690 = vmatpush2.msra.mxu0 0.0
        %691 = vmatprep.subr.mxu0 0.0
        %692 = vmatpush2.msra.mxu0 0.0
        %693 = vmatprep.subr.mxu0 0.0
        %694 = vmatpush2.msra.mxu0 0.0
        %695 = vmatprep.subr.mxu0 0.0
        %696 = vmatpush2.msra.mxu0 0.0
        %697 = vmatprep.subr.mxu0 0.0
        %698 = vmatpush2.msra.mxu0 0.0
        %699 = vmatprep.subr.mxu0 0.0
        %700 = vmatpush2.msra.mxu0 0.0
        %701 = vmatprep.subr.mxu0 0.0
        %702 = vmatpush2.msra.mxu0 0.0
        %703 = vmatprep.subr.mxu0 0.0
        %704 = vmatpush2.msra.mxu0 0.0
        %705 = vmatprep.subr.mxu0 0.0
        %706 = vmatpush2.msra.mxu0 0.0
        %707 = vmatprep.subr.mxu0 0.0
        %708 = vmatpush2.msra.mxu0 0.0
        %709 = vmatprep.subr.mxu0 0.0
        %710 = vmatpush2.msra.mxu0 0.0
        %711 = vmatprep.subr.mxu0 0.0
        %712 = vmatpush2.msra.mxu0 0.0
        %713 = vmatprep.mubr.f32.mxu0 0.0
        %714 = vmatmul.mubr.f32.gmra.mxu0 %v644
        %v715 = vpop.f32.mrf.mxu0
        %v716 = vadd.f32 0.0, %v715
        %v717 = vpop.f32.mrf.mxu0
        %718 = vmatprep.mubr.f32.mxu0 0.0
        %719 = vmatmul.mubr.f32.gmra.mxu0 %v647
        %v720 = vpop.f32.mrf.mxu0
        %v721 = vadd.f32 0.0, %v720
        %v722 = vpop.f32.mrf.mxu0
        %723 = vdwg.mxu0
        %vm724 = vcmask 261120
        %v726 = vsel %vm724, %v634, 0
        %v729 = vsel %vm724, %v635, 0
        %731 = vmatprep.subr.mxu0 0.0
        %732 = vmatpush1.msra.mxu0 0.0
        %733 = vmatprep.subr.mxu0 0.0
        %734 = vmatpush1.msra.mxu0 0.0
        %735 = vmatprep.subr.mxu0 0.0
        %736 = vmatpush1.msra.mxu0 0.0
        %737 = vmatprep.subr.mxu0 0.0
        %738 = vmatpush1.msra.mxu0 0.0
        %739 = vmatprep.subr.mxu0 0.0
        %740 = vmatpush1.msra.mxu0 0.0
        %741 = vmatprep.subr.mxu0 0.0
        %742 = vmatpush1.msra.mxu0 0.0
        %743 = vmatprep.subr.mxu0 0.0
        %744 = vmatpush1.msra.mxu0 0.0
        %745 = vmatprep.subr.mxu0 0.0
        %746 = vmatpush1.msra.mxu0 0.0
        %747 = vmatprep.subr.mxu0 0.0
        %748 = vmatpush1.msra.mxu0 0.0
        %749 = vmatprep.subr.mxu0 0.0
        %750 = vmatpush1.msra.mxu0 0.0
        %751 = vmatprep.subr.mxu0 0.0
        %752 = vmatpush1.msra.mxu0 0.0
        %753 = vmatprep.subr.mxu0 0.0
        %754 = vmatpush1.msra.mxu0 0.0
        %755 = vmatprep.subr.mxu0 0.0
        %756 = vmatpush1.msra.mxu0 %v639
        %757 = vmatprep.subr.mxu0 0.0
        %758 = vmatpush1.msra.mxu0 %v638
        %759 = vmatprep.subr.mxu0 0.0
        %760 = vmatpush1.msra.mxu0 %v637
        %761 = vmatprep.subr.mxu0 0.0
        %762 = vmatpush1.msra.mxu0 %v636
        %763 = vmatprep.subr.mxu0 0.0
        %764 = vmatpush2.msra.mxu0 0.0
        %765 = vmatprep.subr.mxu0 0.0
        %766 = vmatpush2.msra.mxu0 0.0
        %767 = vmatprep.subr.mxu0 0.0
        %768 = vmatpush2.msra.mxu0 0.0
        %769 = vmatprep.subr.mxu0 0.0
        %770 = vmatpush2.msra.mxu0 0.0
        %771 = vmatprep.subr.mxu0 0.0
        %772 = vmatpush2.msra.mxu0 0.0
        %773 = vmatprep.subr.mxu0 0.0
        %774 = vmatpush2.msra.mxu0 0.0
        %775 = vmatprep.subr.mxu0 0.0
        %776 = vmatpush2.msra.mxu0 0.0
        %777 = vmatprep.subr.mxu0 0.0
        %778 = vmatpush2.msra.mxu0 0.0
        %779 = vmatprep.subr.mxu0 0.0
        %780 = vmatpush2.msra.mxu0 0.0
        %781 = vmatprep.subr.mxu0 0.0
        %782 = vmatpush2.msra.mxu0 0.0
        %783 = vmatprep.subr.mxu0 0.0
        %784 = vmatpush2.msra.mxu0 0.0
        %785 = vmatprep.subr.mxu0 0.0
        %786 = vmatpush2.msra.mxu0 0.0
        %787 = vmatprep.subr.mxu0 0.0
        %788 = vmatpush2.msra.mxu0 0.0
        %789 = vmatprep.subr.mxu0 0.0
        %790 = vmatpush2.msra.mxu0 0.0
        %791 = vmatprep.subr.mxu0 0.0
        %792 = vmatpush2.msra.mxu0 0.0
        %793 = vmatprep.subr.mxu0 0.0
        %794 = vmatpush2.msra.mxu0 0.0
        %795 = vmatprep.mubr.f32.mxu0 0.0
        %796 = vmatmul.mubr.f32.gmra.mxu0 %v726
        %v797 = vpop.f32.mrf.mxu0
        %v798 = vadd.f32 %v716, %v797
        %v799 = vpop.f32.mrf.mxu0
        %800 = vmatprep.mubr.f32.mxu0 0.0
        %801 = vmatmul.mubr.f32.gmra.mxu0 %v729
        %v802 = vpop.f32.mrf.mxu0
        %v803 = vadd.f32 %v721, %v802
        %v804 = vpop.f32.mrf.mxu0
        %805 = vdwg.mxu0
        %v806 = vld [vmem:[%s5] sm:$0x1]
        %v808 = vlaneseq
        %v809 = vshrl.u32 %v808, 7
        %v810 = vsub.s32 0, %v809
        %v811 = vrot.slane %v806, %v810
        %v813 = vadd.f32 %v798, %v811
        %v814 = vadd.f32 %v803, %v811
        %v815 = vld [vmem:[%s6] sm:$0xff]
        %v816 = vld [vmem:[%s6 + $0x8] sm:$0xff]
        %v817 = vld [vmem:[%s6 + $0x10] sm:$0xff]
        %v818 = vld [vmem:[%s6 + $0x18] sm:$0xff]
        %v819 = vld [vmem:[%s6 + $0x20] sm:$0xff]
        %v820 = vld [vmem:[%s6 + $0x28] sm:$0xff]
        %v822 = vsel %vm447, %v521, 0
        %v825 = vsel %vm447, %v526, 0
        %827 = vmatprep.subr.mxu0 0.0
        %828 = vmatpush1.msra.mxu0 0.0
        %829 = vmatprep.subr.mxu0 0.0
        %830 = vmatpush1.msra.mxu0 0.0
        %831 = vmatprep.subr.mxu0 0.0
        %832 = vmatpush1.msra.mxu0 0.0
        %833 = vmatprep.subr.mxu0 0.0
        %834 = vmatpush1.msra.mxu0 0.0
        %835 = vmatprep.subr.mxu0 0.0
        %836 = vmatpush1.msra.mxu0 0.0
        %837 = vmatprep.subr.mxu0 0.0
        %838 = vmatpush1.msra.mxu0 0.0
        %839 = vmatprep.subr.mxu0 0.0
        %840 = vmatpush1.msra.mxu0 0.0
        %841 = vmatprep.subr.mxu0 0.0
        %842 = vmatpush1.msra.mxu0 0.0
        %843 = vmatprep.subr.mxu0 0.0
        %844 = vmatpush1.msra.mxu0 0.0
        %845 = vmatprep.subr.mxu0 0.0
        %846 = vmatpush1.msra.mxu0 0.0
        %847 = vmatprep.subr.mxu0 0.0
        %848 = vmatpush1.msra.mxu0 %v820
        %849 = vmatprep.subr.mxu0 0.0
        %850 = vmatpush1.msra.mxu0 %v819
        %851 = vmatprep.subr.mxu0 0.0
        %852 = vmatpush1.msra.mxu0 %v818
        %853 = vmatprep.subr.mxu0 0.0
        %854 = vmatpush1.msra.mxu0 %v817
        %855 = vmatprep.subr.mxu0 0.0
        %856 = vmatpush1.msra.mxu0 %v816
        %857 = vmatprep.subr.mxu0 0.0
        %858 = vmatpush1.msra.mxu0 %v815
        %859 = vmatprep.subr.mxu0 0.0
        %860 = vmatpush2.msra.mxu0 0.0
        %861 = vmatprep.subr.mxu0 0.0
        %862 = vmatpush2.msra.mxu0 0.0
        %863 = vmatprep.subr.mxu0 0.0
        %864 = vmatpush2.msra.mxu0 0.0
        %865 = vmatprep.subr.mxu0 0.0
        %866 = vmatpush2.msra.mxu0 0.0
        %867 = vmatprep.subr.mxu0 0.0
        %868 = vmatpush2.msra.mxu0 0.0
        %869 = vmatprep.subr.mxu0 0.0
        %870 = vmatpush2.msra.mxu0 0.0
        %871 = vmatprep.subr.mxu0 0.0
        %872 = vmatpush2.msra.mxu0 0.0
        %873 = vmatprep.subr.mxu0 0.0
        %874 = vmatpush2.msra.mxu0 0.0
        %875 = vmatprep.subr.mxu0 0.0
        %876 = vmatpush2.msra.mxu0 0.0
        %877 = vmatprep.subr.mxu0 0.0
        %878 = vmatpush2.msra.mxu0 0.0
        %879 = vmatprep.subr.mxu0 0.0
        %880 = vmatpush2.msra.mxu0 0.0
        %881 = vmatprep.subr.mxu0 0.0
        %882 = vmatpush2.msra.mxu0 0.0
        %883 = vmatprep.subr.mxu0 0.0
        %884 = vmatpush2.msra.mxu0 0.0
        %885 = vmatprep.subr.mxu0 0.0
        %886 = vmatpush2.msra.mxu0 0.0
        %887 = vmatprep.subr.mxu0 0.0
        %888 = vmatpush2.msra.mxu0 0.0
        %889 = vmatprep.subr.mxu0 0.0
        %890 = vmatpush2.msra.mxu0 0.0
        %891 = vmatprep.mubr.f32.mxu0 0.0
        %892 = vmatmul.mubr.f32.gmra.mxu0 %v822
        %v893 = vpop.f32.mrf.mxu0
        %v894 = vadd.f32 0.0, %v893
        %v895 = vpop.f32.mrf.mxu0
        %896 = vmatprep.mubr.f32.mxu0 0.0
        %897 = vmatmul.mubr.f32.gmra.mxu0 %v825
        %v898 = vpop.f32.mrf.mxu0
        %v899 = vadd.f32 0.0, %v898
        %v900 = vpop.f32.mrf.mxu0
        %901 = vdwg.mxu0
        %v902 = vmul.f32 %v894, %v894
        %v903 = vmul.f32 %v899, %v899
        %v904 = vld [vmem:[%s8] sm:$0xff]
        %v905 = vld [vmem:[%s8 + $0x8] sm:$0xff]
        %v906 = vld [vmem:[%s8 + $0x10] sm:$0xff]
        %v907 = vld [vmem:[%s8 + $0x18] sm:$0xff]
        %v908 = vld [vmem:[%s8 + $0x20] sm:$0xff]
        %v909 = vld [vmem:[%s8 + $0x28] sm:$0xff]
        %v911 = vsel %vm447, %v902, 0
        %v914 = vsel %vm447, %v903, 0
        %916 = vmatprep.subr.mxu0 0.0
        %917 = vmatpush1.msra.mxu0 0.0
        %918 = vmatprep.subr.mxu0 0.0
        %919 = vmatpush1.msra.mxu0 0.0
        %920 = vmatprep.subr.mxu0 0.0
        %921 = vmatpush1.msra.mxu0 0.0
        %922 = vmatprep.subr.mxu0 0.0
        %923 = vmatpush1.msra.mxu0 0.0
        %924 = vmatprep.subr.mxu0 0.0
        %925 = vmatpush1.msra.mxu0 0.0
        %926 = vmatprep.subr.mxu0 0.0
        %927 = vmatpush1.msra.mxu0 0.0
        %928 = vmatprep.subr.mxu0 0.0
        %929 = vmatpush1.msra.mxu0 0.0
        %930 = vmatprep.subr.mxu0 0.0
        %931 = vmatpush1.msra.mxu0 0.0
        %932 = vmatprep.subr.mxu0 0.0
        %933 = vmatpush1.msra.mxu0 0.0
        %934 = vmatprep.subr.mxu0 0.0
        %935 = vmatpush1.msra.mxu0 0.0
        %936 = vmatprep.subr.mxu0 0.0
        %937 = vmatpush1.msra.mxu0 %v909
        %938 = vmatprep.subr.mxu0 0.0
        %939 = vmatpush1.msra.mxu0 %v908
        %940 = vmatprep.subr.mxu0 0.0
        %941 = vmatpush1.msra.mxu0 %v907
        %942 = vmatprep.subr.mxu0 0.0
        %943 = vmatpush1.msra.mxu0 %v906
        %944 = vmatprep.subr.mxu0 0.0
        %945 = vmatpush1.msra.mxu0 %v905
        %946 = vmatprep.subr.mxu0 0.0
        %947 = vmatpush1.msra.mxu0 %v904
        %948 = vmatprep.subr.mxu0 0.0
        %949 = vmatpush2.msra.mxu0 0.0
        %950 = vmatprep.subr.mxu0 0.0
        %951 = vmatpush2.msra.mxu0 0.0
        %952 = vmatprep.subr.mxu0 0.0
        %953 = vmatpush2.msra.mxu0 0.0
        %954 = vmatprep.subr.mxu0 0.0
        %955 = vmatpush2.msra.mxu0 0.0
        %956 = vmatprep.subr.mxu0 0.0
        %957 = vmatpush2.msra.mxu0 0.0
        %958 = vmatprep.subr.mxu0 0.0
        %959 = vmatpush2.msra.mxu0 0.0
        %960 = vmatprep.subr.mxu0 0.0
        %961 = vmatpush2.msra.mxu0 0.0
        %962 = vmatprep.subr.mxu0 0.0
        %963 = vmatpush2.msra.mxu0 0.0
        %964 = vmatprep.subr.mxu0 0.0
        %965 = vmatpush2.msra.mxu0 0.0
        %966 = vmatprep.subr.mxu0 0.0
        %967 = vmatpush2.msra.mxu0 0.0
        %968 = vmatprep.subr.mxu0 0.0
        %969 = vmatpush2.msra.mxu0 0.0
        %970 = vmatprep.subr.mxu0 0.0
        %971 = vmatpush2.msra.mxu0 0.0
        %972 = vmatprep.subr.mxu0 0.0
        %973 = vmatpush2.msra.mxu0 0.0
        %974 = vmatprep.subr.mxu0 0.0
        %975 = vmatpush2.msra.mxu0 0.0
        %976 = vmatprep.subr.mxu0 0.0
        %977 = vmatpush2.msra.mxu0 0.0
        %978 = vmatprep.subr.mxu0 0.0
        %979 = vmatpush2.msra.mxu0 0.0
        %980 = vmatprep.mubr.f32.mxu0 0.0
        %981 = vmatmul.mubr.f32.gmra.mxu0 %v911
        %v982 = vpop.f32.mrf.mxu0
        %v983 = vadd.f32 0.0, %v982
        %v984 = vpop.f32.mrf.mxu0
        %985 = vmatprep.mubr.f32.mxu0 0.0
        %986 = vmatmul.mubr.f32.gmra.mxu0 %v914
        %v987 = vpop.f32.mrf.mxu0
        %v988 = vadd.f32 0.0, %v987
        %v989 = vpop.f32.mrf.mxu0
        %990 = vdwg.mxu0
        %v991 = vrsqrt.pop %v983
        %v992 = vmul.f32 %v983, %v991
        %vm993 = vcmp.eq.f32.partialorder %v983, inf
        %v994 = vsel %vm993, %v983, %v992
        %vm995 = vcmp.eq.f32.partialorder %v983, 0.0
        %v996 = vand.u32 %v983, 2147483648
        %v997 = vsel %vm995, %v996, %v994
        %v998 = vrsqrt.pop %v988
        %v999 = vmul.f32 %v988, %v998
        %vm1000 = vcmp.eq.f32.partialorder %v988, inf
        %v1001 = vsel %vm1000, %v988, %v999
        %vm1002 = vcmp.eq.f32.partialorder %v988, 0.0
        %v1003 = vand.u32 %v988, 2147483648
        %v1004 = vsel %vm1002, %v1003, %v1001
        %v1005 = vadd.f32 %v997, 1e-08
        %v1006 = vadd.f32 %v1004, 1e-08
        %v1007 = vsub.f32 0.0, %v1005
        %v1008 = vsub.f32 0.0, %v1006
        %v1009 = vmul.f32 %v1007, 1.442695
        %v1010 = vpow.pop %v1009
        %v1011 = vmul.f32 %v1008, 1.442695
        %v1012 = vpow.pop %v1011
        %v1013 = vadd.f32 %v1010, 1.0
        %v1014 = vadd.f32 %v1012, 1.0
        %v1015 = vrcp.pop %v1013
        %v1016 = vrcp.pop %v1014
        %v1017 = vmul.f32 %v894, %v1015
        %v1018 = vmul.f32 %v899, %v1016
        %1019 = vst.msk [vmem:[%s400] sm:$0xff] %vm447, %v1017
        %1020 = vst.msk [vmem:[%s400 + $0x8] sm:$0xff] %vm447, %v1018
        %v1021 = vmax.f32 %v813, 0.0
        %v1022 = vmax.f32 %v814, 0.0
        %1023 = vst.msk [vmem:[%s394] sm:$0xff] %vm724, %v1021
        %1024 = vst.msk [vmem:[%s394 + $0x8] sm:$0xff] %vm724, %v1022
        %s1025 = sand.u32 %s232, 1
        %s1026 = scalar_lea.sflag [#allocation3], %s1025
        %s1027 = sand.u32 %s232, 1
        %s1028 = smul.addr %s1027, 16
        %s1029 = scalar_lea.vmem [#allocation2], %s1028
        %s1030 = sand.u32 %s258, 1
        %s1031 = sand.u32 %s258, 1
        %s1032 = smul.addr %s1031, 16
        %s1033 = scalar_lea.vmem [#allocation4], %s1032
        // Predicated region
        $region57: #{gbp_forward.1} parent=55 // pred_check
          %p1034 = pneg %p242
        $region58: #{gbp_forward.1} parent=55 // pred_check_branch
          %1036 = sbr.rel (%p1034) target = $region60
        $region59: #{gbp_forward.1} parent=55 // pred_region
          %s1037 = smul.u32 2, %s25
          %s1038 = ssub.s32 3, %s1037
          %p1039 = scmp.lt.s32.totalorder %s1038, 2
          %s1040 = scalar_select %p1039, %s1038, 2
          %s1041 = smul.u32 128, %s1040
          %s1043 = ssub.s32 256, %s1041
          %1044 = vsyncadd %s1026, %s1043
          %p1045 = scmp.ne.s32.totalorder 0, %s1041
          %s1046 = smul.addr %s1037, 128
          %s1047 = scalar_lea.hbm %s9, %s1046
          %s1048 = smul.u32 8, %s1040
          %s1049 = sshll.u32 %s1029, 4
          %s1050 = int_to_ptr.vmem [resolvable:$true] %s1049
          %s1051 = sshll.u32 %s1048, 4
          %1055 = dma.vmem_to_hbm [thread:$0]  (%p1045), %s1050, %s1051, %s1047, %s1026, 128, 128, 8
        $region60: #{gbp_forward.1} parent=55 // pred_fallthru
          _
        // Predicated region
        $region61: #{gbp_forward.1} parent=55 // pred_check
          %p1056 = pneg %p268
        $region62: #{gbp_forward.1} parent=55 // pred_check_branch
          %1058 = sbr.rel (%p1056) target = $region64
        $region63: #{gbp_forward.1} parent=55 // pred_region
          %s1059 = smul.u32 2, %s25
          %s1060 = ssub.s32 3, %s1059
          %p1061 = scmp.lt.s32.totalorder %s1060, 2
          %s1062 = scalar_select %p1061, %s1060, 2
          %s1063 = smul.u32 128, %s1062
          %p1064 = scmp.ne.s32.totalorder 0, %s1063
          %s1065 = smul.addr %s1059, 8
          %s1066 = scalar_lea.vmem %s10, %s1065
          // Predicated region
          $region65: #{gbp_forward.1} parent=63 // pred_check
            %p1067 = pneg %p1064
          $region66: #{gbp_forward.1} parent=63 // pred_check_branch
            %1069 = sbr.rel (%p1067) target = $region68
          $region67: #{gbp_forward.1} parent=63 // pred_region
            // Predicated region
            $region69: #{gbp_forward.1} parent=67 // pred_check
              _
            $region70: #{gbp_forward.1} parent=67 // pred_check_branch
              %1071 = sbr.rel (0) target = $region72
            $region71: #{gbp_forward.1} parent=67 // pred_region
              // Predicated region
              $region91: #{gbp_forward.1} parent=71 // pred_check
                _
              $region92: #{gbp_forward.1} parent=71 // pred_check_branch
                %1123 = sbr.rel (0) target = $region94
              $region93: #{gbp_forward.1} parent=71 // pred_region
                %s1124 = sshrl.u32 %s1062, 1
                // While loop
                $region95: #{gbp_forward.1} parent=93 // loop_pre_header
                  _
                $region96: #{gbp_forward.1} parent=93 // loop_header
                  %s1126 = sphi 0, %s1128
                  %p1127 = scmp.ge.s32.totalorder %s1126, %s1124
                  %s1131 = sphi 0, %s1140
                  %s1132 = sphi %s1033, %s1143
                  %s1133 = sphi %s1066, %s1144
                $region97: #{gbp_forward.1} parent=93 // loop_header_branch
                  %1130 = sbr.rel (%p1127) target = $region101
                $region98: #{gbp_forward.1} parent=93 // loop_body
                  %v1134 = vld [vmem:[%s1132] sm:$0xff]
                  %1135 = vst [vmem:[%s1133] sm:$0xff] %v1134
                  %v1136 = vld [vmem:[%s1132 + $0x8] sm:$0xff]
                  %1137 = vst [vmem:[%s1133 + $0x8] sm:$0xff] %v1136
                  %s1138 = sadd.s32 1, %s1131
                  %p1139 = scmp.ge.s32.totalorder %s1138, %s1124
                  %s1140 = scalar_select %p1139, 0, %s1138
                  %s1141 = smul.u32 %s1140, 16
                  %s1142 = smul.u32 %s1140, 16
                  %s1143 = scalar_lea.vmem %s1033, %s1141 [#allocation4]
                  %s1144 = scalar_lea.vmem %s1066, %s1142
                $region99: #{gbp_forward.1} parent=93 // loop_footer
                  %s1128 = sadd.s32 %s1126, 1
                $region100: #{gbp_forward.1} parent=93 // loop_footer_branch
                  %1125 = sbr.rel target = $region96
                $region101: #{gbp_forward.1} parent=93 // loop_exit
                  _
                %s1145 = sshrl.u32 %s1062, 1
                %s1146 = sand.u32 %s1062, 1
                %s1147 = smul.u32 %s1145, 2
                %s1148 = smul.u32 8, %s1147
                %s1149 = scalar_lea.vmem %s1033, %s1148 [#allocation4]
                %s1150 = smul.u32 8, %s1147
                %s1151 = scalar_lea.vmem %s1066, %s1150
                // While loop
                $region102: #{gbp_forward.1} parent=93 // loop_pre_header
                  _
                $region103: #{gbp_forward.1} parent=93 // loop_header
                  %s1153 = sphi 0, %s1155
                  %p1154 = scmp.ge.s32.totalorder %s1153, %s1146
                  %s1158 = sphi 0, %s1165
                  %s1159 = sphi %s1149, %s1168
                  %s1160 = sphi %s1151, %s1169
                $region104: #{gbp_forward.1} parent=93 // loop_header_branch
                  %1157 = sbr.rel (%p1154) target = $region108
                $region105: #{gbp_forward.1} parent=93 // loop_body
                  %v1161 = vld [vmem:[%s1159] sm:$0xff]
                  %1162 = vst [vmem:[%s1160] sm:$0xff] %v1161
                  %s1163 = sadd.s32 1, %s1158
                  %p1164 = scmp.ge.s32.totalorder %s1163, %s1146
                  %s1165 = scalar_select %p1164, 0, %s1163
                  %s1166 = smul.u32 %s1165, 8
                  %s1167 = smul.u32 %s1165, 8
                  %s1168 = scalar_lea.vmem %s1149, %s1166 [#allocation4]
                  %s1169 = scalar_lea.vmem %s1151, %s1167
                $region106: #{gbp_forward.1} parent=93 // loop_footer
                  %s1155 = sadd.s32 %s1153, 1
                $region107: #{gbp_forward.1} parent=93 // loop_footer_branch
                  %1152 = sbr.rel target = $region103
                $region108: #{gbp_forward.1} parent=93 // loop_exit
                  _
              $region94: #{gbp_forward.1} parent=71 // pred_fallthru
                _
              // Predicated region
              $region109: #{gbp_forward.1} parent=71 // pred_check
                _
              $region110: #{gbp_forward.1} parent=71 // pred_check_branch
                %1171 = sbr.rel target = $region112
              $region111: #{gbp_forward.1} parent=71 // pred_region
                _
              $region112: #{gbp_forward.1} parent=71 // pred_fallthru
                _
            $region72: #{gbp_forward.1} parent=67 // pred_fallthru
              _
            // Predicated region
            $region73: #{gbp_forward.1} parent=67 // pred_check
              _
            $region74: #{gbp_forward.1} parent=67 // pred_check_branch
              %1073 = sbr.rel target = $region76
            $region75: #{gbp_forward.1} parent=67 // pred_region
              %s1075 = ssub.s32 256, 1
              %s1076 = sshrl.u32 %s1062, 1
              // While loop
              $region77: #{gbp_forward.1} parent=75 // loop_pre_header
                _
              $region78: #{gbp_forward.1} parent=75 // loop_header
                %s1078 = sphi 0, %s1080
                %p1079 = scmp.ge.s32.totalorder %s1078, %s1076
                %s1083 = sphi 0, %s1092
                %s1084 = sphi %s1033, %s1095
                %s1085 = sphi %s1066, %s1096
              $region79: #{gbp_forward.1} parent=75 // loop_header_branch
                %1082 = sbr.rel (%p1079) target = $region83
              $region80: #{gbp_forward.1} parent=75 // loop_body
                %v1086 = vld [vmem:[%s1084] sm:%s1075]
                %1087 = vst [vmem:[%s1085] sm:%s1075] %v1086
                %v1088 = vld [vmem:[%s1084 + $0x8] sm:%s1075]
                %1089 = vst [vmem:[%s1085 + $0x8] sm:%s1075] %v1088
                %s1090 = sadd.s32 1, %s1083
                %p1091 = scmp.ge.s32.totalorder %s1090, %s1076
                %s1092 = scalar_select %p1091, 0, %s1090
                %s1093 = smul.u32 %s1092, 16
                %s1094 = smul.u32 %s1092, 16
                %s1095 = scalar_lea.vmem %s1033, %s1093 [#allocation4]
                %s1096 = scalar_lea.vmem %s1066, %s1094
              $region81: #{gbp_forward.1} parent=75 // loop_footer
                %s1080 = sadd.s32 %s1078, 1
              $region82: #{gbp_forward.1} parent=75 // loop_footer_branch
                %1077 = sbr.rel target = $region78
              $region83: #{gbp_forward.1} parent=75 // loop_exit
                _
              %s1097 = sshrl.u32 %s1062, 1
              %s1098 = sand.u32 %s1062, 1
              %s1099 = smul.u32 %s1097, 2
              %s1100 = smul.u32 8, %s1099
              %s1101 = scalar_lea.vmem %s1033, %s1100 [#allocation4]
              %s1102 = smul.u32 8, %s1099
              %s1103 = scalar_lea.vmem %s1066, %s1102
              // While loop
              $region84: #{gbp_forward.1} parent=75 // loop_pre_header
                _
              $region85: #{gbp_forward.1} parent=75 // loop_header
                %s1105 = sphi 0, %s1107
                %p1106 = scmp.ge.s32.totalorder %s1105, %s1098
                %s1110 = sphi 0, %s1117
                %s1111 = sphi %s1101, %s1120
                %s1112 = sphi %s1103, %s1121
              $region86: #{gbp_forward.1} parent=75 // loop_header_branch
                %1109 = sbr.rel (%p1106) target = $region90
              $region87: #{gbp_forward.1} parent=75 // loop_body
                %v1113 = vld [vmem:[%s1111] sm:%s1075]
                %1114 = vst [vmem:[%s1112] sm:%s1075] %v1113
                %s1115 = sadd.s32 1, %s1110
                %p1116 = scmp.ge.s32.totalorder %s1115, %s1098
                %s1117 = scalar_select %p1116, 0, %s1115
                %s1118 = smul.u32 %s1117, 8
                %s1119 = smul.u32 %s1117, 8
                %s1120 = scalar_lea.vmem %s1101, %s1118 [#allocation4]
                %s1121 = scalar_lea.vmem %s1103, %s1119
              $region88: #{gbp_forward.1} parent=75 // loop_footer
                %s1107 = sadd.s32 %s1105, 1
              $region89: #{gbp_forward.1} parent=75 // loop_footer_branch
                %1104 = sbr.rel target = $region85
              $region90: #{gbp_forward.1} parent=75 // loop_exit
                _
            $region76: #{gbp_forward.1} parent=67 // pred_fallthru
              _
          $region68: #{gbp_forward.1} parent=63 // pred_fallthru
            _
          %1172 = vnop
        $region64: #{gbp_forward.1} parent=55 // pred_fallthru
          _
      $region56: #{gbp_forward.1} parent=5 // pred_fallthru
        _
      %p1173 = scmp.le.s32.totalorder 2, %s20
      // Predicated region
      $region113: #{gbp_forward.1} parent=5 // pred_check
        %p1174 = pneg %p1173
      $region114: #{gbp_forward.1} parent=5 // pred_check_branch
        %1176 = sbr.rel (%p1174) target = $region116
      $region115: #{gbp_forward.1} parent=5 // pred_region
        %s1177 = ssub.s32 %s20, 2
        // Predicated region
        $region117: #{gbp_forward.1} parent=115 // pred_check
          %p1178 = pneg %p248
        $region118: #{gbp_forward.1} parent=115 // pred_check_branch
          %1180 = sbr.rel (%p1178) target = $region120
        $region119: #{gbp_forward.1} parent=115 // pred_region
          %s1181 = sand.u32 %s233, 1
          %s1182 = scalar_lea.sflag [#allocation3], %s1181
          %s1183 = sand.u32 %s233, 1
          %s1184 = smul.addr %s1183, 16
          %s1185 = scalar_lea.vmem [#allocation2], %s1184
          %1186 = dma.done %s1182, 256
        $region120: #{gbp_forward.1} parent=115 // pred_fallthru
          _
        // Predicated region
        $region121: #{gbp_forward.1} parent=115 // pred_check
          %p1187 = pneg %p274
        $region122: #{gbp_forward.1} parent=115 // pred_check_branch
          %1189 = sbr.rel (%p1187) target = $region124
        $region123: #{gbp_forward.1} parent=115 // pred_region
          %s1190 = sand.u32 %s259, 1
          %s1191 = sand.u32 %s259, 1
          %s1192 = smul.addr %s1191, 16
          %s1193 = scalar_lea.vmem [#allocation4], %s1192
        $region124: #{gbp_forward.1} parent=115 // pred_fallthru
          _
      $region116: #{gbp_forward.1} parent=5 // pred_fallthru
        _
    $region6: #{gbp_forward.1} parent=1 // loop_footer
      %s24 = sadd.s32 1, %s20
    $region7: #{gbp_forward.1} parent=1 // loop_footer_branch
      %19 = sbr.rel target = $region3
    $region8: #{gbp_forward.1} parent=1 // loop_exit
      _
    %1194 = vsyncpa [#allocation3], 1
    %s1195 = scalar_lea.sflag [#allocation3], 1
    %1196 = vsyncpa %s1195, 1

</llo_original>
